<compile_context>
chip_gen: v5e
topology: v5e:2x2
jax: 0.10.0
libtpu: 0.0.40
codegen_flags: <defaults>
</compile_context>

<pallas_src>
import functools

import jax
import jax.numpy as jnp
from jax.experimental import pallas as pl
from jax.experimental.pallas import tpu as pltpu


def _round_up(x, m):
    return ((x + m - 1) // m) * m


def _ffn_kernel(x_ref, w1_ref, b1_ref, w2_ref, b2_ref, gamma_ref, beta_ref,
                o_ref, acc_ref, xn_ref, *, eps):
    """Grid = (token_tiles, d_hid_tiles).  Axis 1 is the d_hid reduction."""
    k = pl.program_id(1)

    # ---- First K step: LayerNorm (f32) once per token tile; seed the accumulator
    #      with residual + bias2 so the final step is just a cast + store.
    @pl.when(k == 0)
    def _():
        xf = x_ref[...].astype(jnp.float32)                 # residual / LN input
        mean = jnp.mean(xf, axis=-1, keepdims=True)
        centered = xf - mean
        var = jnp.mean(centered * centered, axis=-1, keepdims=True)
        xn = centered * jax.lax.rsqrt(var + eps)
        xn = (xn * gamma_ref[...].astype(jnp.float32)
              + beta_ref[...].astype(jnp.float32))
        xn_ref[...] = xn.astype(xn_ref.dtype)               # cached in MXU dtype
        acc_ref[...] = xf + b2_ref[...].astype(jnp.float32)

    # ---- K-slice of the FFN: relu(xn @ w1[:, k] + b1[k]) @ w2[k, :]  (f32 acc)
    h = jnp.dot(xn_ref[...], w1_ref[...], preferred_element_type=jnp.float32)
    h = jnp.maximum(h + b1_ref[...].astype(jnp.float32), 0.0)
    acc_ref[...] += jnp.dot(h.astype(w2_ref.dtype), w2_ref[...],
                            preferred_element_type=jnp.float32)

    # ---- Last K step: store.  Residual + bias2 already folded into the init.
    # TODO(synk): training-mode dropout (pltpu.prng_random_bits mask) not
    # implemented; inference semantics (identity) are used here.
    @pl.when(k == pl.num_programs(1) - 1)
    def _():
        o_ref[...] = acc_ref[...].astype(o_ref.dtype)


def positionwise_feed_forward(x, w1, b1, w2, b2, gamma, beta, *, eps=1e-6,
                              mxu_dtype=jnp.bfloat16, row_tile=512):
    """x: (B, S, d_in). w1: (d_in, d_hid), w2: (d_hid, d_in). Returns (B, S, d_in)."""
    B, S, d_in = x.shape
    d_hid = w1.shape[1]
    N = B * S

    a_sz = jnp.dtype(x.dtype).itemsize
    m_sz = jnp.dtype(mxu_dtype).itemsize

    # --- Generation-aware VMEM capacity (64 MiB/TC on v7x, 128 MiB on v5e/v6e).
    try:
        vmem_cap = int(pltpu.get_tpu_info().vmem_capacity_bytes)
    except Exception:
        vmem_cap = 64 << 20           # conservative fallback: safe on every gen
    vmem_budget = int(0.80 * vmem_cap)

    # --- Token tile: dtype-aware sublane multiple; keep >= 2 token tiles when N
    #     allows so the "parallel" axis can split across v7x's 2 TensorCores.
    sub = max(8, 32 // m_sz)          # 8 (f32), 16 (bf16), 32 (int8/fp8)
    tm = min(row_tile, _round_up(N, sub))
    if N >= 2 * sub:
        tm = min(tm, _round_up(-(-N // 2), sub))

    def footprint(tm_, tk_):
        return (2 * tm_ * d_in * a_sz                      # x tile (dbl-buffered)
                + 2 * tm_ * d_in * a_sz                    # out tile
                + tm_ * d_in * 4                           # f32 accumulator
                + tm_ * d_in * m_sz                        # cached LayerNorm(x)
                + 2 * 2 * d_in * tk_ * m_sz                # w1 + w2 slices
                + 2 * (tk_ + 3 * d_in) * 4                 # b1, b2, gamma, beta
                + tm_ * tk_ * (4 + m_sz))                  # h transient (f32+cast)

    # --- Hidden tile: prefer the full d_hid (weights resident in VMEM, DMA'd
    #     once for the whole grid); otherwise the largest MXU-friendly slice.
    tk = None
    for cand in [d_hid] + [c for c in (4096, 2048, 1024, 512, 256, 128)
                           if c < d_hid]:
        if footprint(tm, cand) <= vmem_budget:
            tk = cand
            break
    if tk is None:
        tk = 128
        while tm > sub and footprint(tm, tk) > vmem_budget:
            tm = max(sub, _round_up(tm // 2, sub))

    Np = _round_up(N, tm)
    Kp = _round_up(d_hid, tk)
    n_k = Kp // tk

    # --- Flatten / cast / pad.  Weights run the MXU in mxu_dtype (full-rate bf16
    #     on v5e/v6e/v7x); LayerNorm, biases, residual, accumulation stay f32.
    x2d = x.reshape(N, d_in)
    if Np != N:
        x2d = jnp.pad(x2d, ((0, Np - N), (0, 0)))
    w1c = w1.astype(mxu_dtype)
    w2c = w2.astype(mxu_dtype)
    if Kp != d_hid:                   # only when K-tiling is actually needed
        w1c = jnp.pad(w1c, ((0, 0), (0, Kp - d_hid)))
        w2c = jnp.pad(w2c, ((0, Kp - d_hid), (0, 0)))
        b1p = jnp.pad(b1, (0, Kp - d_hid))
    else:
        b1p = b1

    b1_2d = b1p.reshape(1, Kp)
    b2_2d = b2.reshape(1, d_in)
    gamma_2d = gamma.reshape(1, d_in)
    beta_2d = beta.reshape(1, d_in)

    est = footprint(tm, tk)
    vmem_limit = int(min(int(0.85 * vmem_cap), max(32 << 20, 2 * est)))

    cost = pl.CostEstimate(
        flops=4 * Np * d_in * Kp,                       # two matmuls, 2 flop/MAC
        transcendentals=Np,                             # one rsqrt per token row
        bytes_accessed=(2 * Np * d_in * a_sz            # x in + out
                        + 2 * d_in * Kp * m_sz))        # weights (resident)

    kernel = functools.partial(_ffn_kernel, eps=eps)

    out2d = pl.pallas_call(
        kernel,
        out_shape=jax.ShapeDtypeStruct((Np, d_in), x.dtype),
        grid_spec=pltpu.PrefetchScalarGridSpec(
            num_scalar_prefetch=0,
            grid=(Np // tm, n_k),
            in_specs=[
                pl.BlockSpec((tm, d_in), lambda i, k: (i, 0)),   # x (residual)
                pl.BlockSpec((d_in, tk), lambda i, k: (0, k)),   # w1 K-slice
                pl.BlockSpec((1, tk),    lambda i, k: (0, k)),   # b1 K-slice
                pl.BlockSpec((tk, d_in), lambda i, k: (k, 0)),   # w2 K-slice
                pl.BlockSpec((1, d_in),  lambda i, k: (0, 0)),   # b2
                pl.BlockSpec((1, d_in),  lambda i, k: (0, 0)),   # gamma
                pl.BlockSpec((1, d_in),  lambda i, k: (0, 0)),   # beta
            ],
            out_specs=pl.BlockSpec((tm, d_in), lambda i, k: (i, 0)),
            scratch_shapes=[
                pltpu.VMEM((tm, d_in), jnp.float32),   # f32 accumulator
                pltpu.VMEM((tm, d_in), mxu_dtype),     # cached LayerNorm(x)
            ],
        ),
        compiler_params=pltpu.CompilerParams(
            dimension_semantics=("parallel", "arbitrary"),
            vmem_limit_bytes=vmem_limit),
        cost_estimate=cost,
    )(x2d, w1c, b1_2d, w2c, b2_2d, gamma_2d, beta_2d)

    return out2d[:N].reshape(B, S, d_in)


def _reference(x, w1, b1, w2, b2, gamma, beta, eps=1e-6):
    xf = x.astype(jnp.float32)
    mean = jnp.mean(xf, axis=-1, keepdims=True)
    var = jnp.mean((xf - mean) ** 2, axis=-1, keepdims=True)
    xn = (xf - mean) / jnp.sqrt(var + eps) * gamma + beta
    h = jnp.maximum(xn @ w1 + b1, 0.0)
    y = h @ w2 + b2
    return (y + xf).astype(x.dtype)


if __name__ == "__main__":
    # Small, lane-dense shapes (d_in multiple of 128 avoids masked stores).
    B, S, d_in, d_hid = 2, 8, 128, 256

    key = jax.random.PRNGKey(0)
    kx, kw1, kb1, kw2, kb2 = jax.random.split(key, 5)

    x = jax.random.normal(kx, (B, S, d_in), dtype=jnp.float32)
    w1 = jax.random.normal(kw1, (d_in, d_hid), dtype=jnp.float32) * 0.1
    b1 = jax.random.normal(kb1, (d_hid,), dtype=jnp.float32) * 0.01
    w2 = jax.random.normal(kw2, (d_hid, d_in), dtype=jnp.float32) * 0.1
    b2 = jax.random.normal(kb2, (d_in,), dtype=jnp.float32) * 0.01
    gamma = jnp.ones((d_in,), dtype=jnp.float32)
    beta = jnp.zeros((d_in,), dtype=jnp.float32)

    ref = _reference(x, w1, b1, w2, b2, gamma, beta)

    # Exact-precision path (MXU operands in f32) — tight tolerance.
    out_f32 = jax.block_until_ready(
        positionwise_feed_forward(x, w1, b1, w2, b2, gamma, beta,
                                  mxu_dtype=jnp.float32))
    assert out_f32.shape == (B, S, d_in)
    assert jnp.allclose(out_f32, ref, atol=1e-4, rtol=1e-4), "f32 path mismatch"

    # Default fast path (bf16 MXU operands, f32 accumulation) — loose tolerance.
    out_bf16 = jax.block_until_ready(
        positionwise_feed_forward(x, w1, b1, w2, b2, gamma, beta))
    assert out_bf16.shape == (B, S, d_in)
    assert jnp.allclose(out_bf16, ref, atol=5e-2, rtol=5e-2), "bf16 path mismatch"

    print("KERNEL_OK")
</pallas_src>

<mosaic_0001>
module attributes {stable_mosaic.version = 11 : i64} {
  func.func @_ffn_kernel(%arg0: i32, %arg1: i32, %arg2: memref<8x128xf32, #tpu.memory_space<vmem>>, %arg3: memref<128x256xf32, #tpu.memory_space<vmem>>, %arg4: memref<1x256xf32, #tpu.memory_space<vmem>>, %arg5: memref<256x128xf32, #tpu.memory_space<vmem>>, %arg6: memref<1x128xf32, #tpu.memory_space<vmem>>, %arg7: memref<1x128xf32, #tpu.memory_space<vmem>>, %arg8: memref<1x128xf32, #tpu.memory_space<vmem>>, %arg9: memref<8x128xf32, #tpu.memory_space<vmem>>, %arg10: memref<8x128xf32, #tpu.memory_space<vmem>>, %arg11: memref<8x128xf32, #tpu.memory_space<vmem>>) attributes {dimension_semantics = [#tpu.dimension_semantics<parallel>, #tpu.dimension_semantics<arbitrary>], iteration_bounds = array<i64: 2, 1>, scalar_prefetch = 0 : i64, scratch_operands = 2 : i64, tpu.core_type = #tpu.core_type<tc>, window_params = [{transform_indices = @transform_0, window_bounds = array<i64: 8, 128>}, {transform_indices = @transform_1, window_bounds = array<i64: 128, 256>}, {transform_indices = @transform_2, window_bounds = array<i64: 1, 256>}, {transform_indices = @transform_3, window_bounds = array<i64: 256, 128>}, {pipeline_mode = #tpu.pipeline_mode<synchronous>, transform_indices = @transform_4, window_bounds = array<i64: 1, 128>}, {pipeline_mode = #tpu.pipeline_mode<synchronous>, transform_indices = @transform_5, window_bounds = array<i64: 1, 128>}, {pipeline_mode = #tpu.pipeline_mode<synchronous>, transform_indices = @transform_6, window_bounds = array<i64: 1, 128>}, {transform_indices = @transform_7, window_bounds = array<i64: 8, 128>}]} {
    %c0_i32 = arith.constant 0 : i32
    %0 = arith.cmpi eq, %arg1, %c0_i32 : i32
    %1 = arith.extui %0 : i1 to i32
    %c0_i32_0 = arith.constant 0 : i32
    %2 = arith.cmpi ne, %1, %c0_i32_0 : i32
    scf.if %2 {
      %c0_16 = arith.constant 0 : index
      %c0_17 = arith.constant 0 : index
      %19 = vector.load %arg2[%c0_16, %c0_17] : memref<8x128xf32, #tpu.memory_space<vmem>>, vector<8x128xf32>
      %cst_18 = arith.constant dense<0.000000e+00> : vector<8xf32>
      %20 = vector.multi_reduction <add>, %19, %cst_18 [1] : vector<8x128xf32> to vector<8xf32>
      %21 = vector.shape_cast %20 : vector<8xf32> to vector<8x1xf32>
      %cst_19 = arith.constant 1.280000e+02 : f32
      %22 = vector.broadcast %cst_19 : f32 to vector<8x1xf32>
      %23 = arith.divf %21, %22 : vector<8x1xf32>
      %24 = vector.broadcast %23 : vector<8x1xf32> to vector<8x128xf32>
      %25 = arith.subf %19, %24 : vector<8x128xf32>
      %26 = arith.mulf %25, %25 : vector<8x128xf32>
      %cst_20 = arith.constant dense<0.000000e+00> : vector<8xf32>
      %27 = vector.multi_reduction <add>, %26, %cst_20 [1] : vector<8x128xf32> to vector<8xf32>
      %28 = vector.shape_cast %27 : vector<8xf32> to vector<8x1xf32>
      %cst_21 = arith.constant 1.280000e+02 : f32
      %29 = vector.broadcast %cst_21 : f32 to vector<8x1xf32>
      %30 = arith.divf %28, %29 : vector<8x1xf32>
      %cst_22 = arith.constant 9.99999997E-7 : f32
      %31 = vector.broadcast %cst_22 : f32 to vector<8x1xf32>
      %32 = arith.addf %30, %31 : vector<8x1xf32>
      %33 = math.rsqrt %32 : vector<8x1xf32>
      %34 = vector.broadcast %33 : vector<8x1xf32> to vector<8x128xf32>
      %35 = arith.mulf %25, %34 : vector<8x128xf32>
      %c0_23 = arith.constant 0 : index
      %c0_24 = arith.constant 0 : index
      %36 = vector.load %arg7[%c0_23, %c0_24] : memref<1x128xf32, #tpu.memory_space<vmem>>, vector<1x128xf32>
      %37 = vector.broadcast %36 : vector<1x128xf32> to vector<8x128xf32>
      %38 = arith.mulf %35, %37 : vector<8x128xf32>
      %c0_25 = arith.constant 0 : index
      %c0_26 = arith.constant 0 : index
      %39 = vector.load %arg8[%c0_25, %c0_26] : memref<1x128xf32, #tpu.memory_space<vmem>>, vector<1x128xf32>
      %40 = vector.broadcast %39 : vector<1x128xf32> to vector<8x128xf32>
      %41 = arith.addf %38, %40 : vector<8x128xf32>
      %c0_27 = arith.constant 0 : index
      %c0_28 = arith.constant 0 : index
      %42 = vector.load %arg11[%c0_27, %c0_28] : memref<8x128xf32, #tpu.memory_space<vmem>>, vector<8x128xf32>
      tpu.vector_store %arg11[%c0_27, %c0_28], %41 {strides = array<i32>} : memref<8x128xf32, #tpu.memory_space<vmem>>, vector<8x128xf32>,
      %c0_29 = arith.constant 0 : index
      %c0_30 = arith.constant 0 : index
      %43 = vector.load %arg6[%c0_29, %c0_30] : memref<1x128xf32, #tpu.memory_space<vmem>>, vector<1x128xf32>
      %44 = vector.broadcast %43 : vector<1x128xf32> to vector<8x128xf32>
      %45 = arith.addf %19, %44 : vector<8x128xf32>
      %c0_31 = arith.constant 0 : index
      %c0_32 = arith.constant 0 : index
      %46 = vector.load %arg10[%c0_31, %c0_32] : memref<8x128xf32, #tpu.memory_space<vmem>>, vector<8x128xf32>
      tpu.vector_store %arg10[%c0_31, %c0_32], %45 {strides = array<i32>} : memref<8x128xf32, #tpu.memory_space<vmem>>, vector<8x128xf32>,
    } else {
    }
    %c0 = arith.constant 0 : index
    %c0_1 = arith.constant 0 : index
    %3 = vector.load %arg11[%c0, %c0_1] : memref<8x128xf32, #tpu.memory_space<vmem>>, vector<8x128xf32>
    %c0_2 = arith.constant 0 : index
    %c0_3 = arith.constant 0 : index
    %4 = vector.load %arg3[%c0_2, %c0_3] : memref<128x256xf32, #tpu.memory_space<vmem>>, vector<128x256xf32>
    %cst = arith.constant dense<0.000000e+00> : vector<8x256xf32>
    %5 = tpu.matmul %3, %4, %cst {dimension_numbers = #tpu.dot_dimension_numbers<[1], [0], [0], [1], [0, 0, 1, 1], [], []>} : vector<8x128xf32>, vector<128x256xf32>, vector<8x256xf32> -> vector<8x256xf32>
    %c0_4 = arith.constant 0 : index
    %c0_5 = arith.constant 0 : index
    %6 = vector.load %arg4[%c0_4, %c0_5] : memref<1x256xf32, #tpu.memory_space<vmem>>, vector<1x256xf32>
    %7 = vector.broadcast %6 : vector<1x256xf32> to vector<8x256xf32>
    %8 = arith.addf %5, %7 : vector<8x256xf32>
    %cst_6 = arith.constant 0.000000e+00 : f32
    %9 = vector.broadcast %cst_6 : f32 to vector<8x256xf32>
    %10 = arith.maximumf %8, %9 : vector<8x256xf32>
    %c0_7 = arith.constant 0 : index
    %c0_8 = arith.constant 0 : index
    %11 = vector.load %arg10[%c0_7, %c0_8] : memref<8x128xf32, #tpu.memory_space<vmem>>, vector<8x128xf32>
    %c0_9 = arith.constant 0 : index
    %c0_10 = arith.constant 0 : index
    %12 = vector.load %arg5[%c0_9, %c0_10] : memref<256x128xf32, #tpu.memory_space<vmem>>, vector<256x128xf32>
    %cst_11 = arith.constant dense<0.000000e+00> : vector<8x128xf32>
    %13 = tpu.matmul %10, %12, %cst_11 {dimension_numbers = #tpu.dot_dimension_numbers<[1], [0], [0], [1], [0, 0, 1, 1], [], []>} : vector<8x256xf32>, vector<256x128xf32>, vector<8x128xf32> -> vector<8x128xf32>
    %14 = arith.addf %11, %13 : vector<8x128xf32>
    %c0_12 = arith.constant 0 : index
    %c0_13 = arith.constant 0 : index
    %15 = vector.load %arg10[%c0_12, %c0_13] : memref<8x128xf32, #tpu.memory_space<vmem>>, vector<8x128xf32>
    tpu.vector_store %arg10[%c0_12, %c0_13], %14 {strides = array<i32>} : memref<8x128xf32, #tpu.memory_space<vmem>>, vector<8x128xf32>,
    %c0_i32_14 = arith.constant 0 : i32
    %16 = arith.cmpi eq, %arg1, %c0_i32_14 : i32
    %17 = arith.extui %16 : i1 to i32
    %c0_i32_15 = arith.constant 0 : i32
    %18 = arith.cmpi ne, %17, %c0_i32_15 : i32
    scf.if %18 {
      %c0_16 = arith.constant 0 : index
      %c0_17 = arith.constant 0 : index
      %19 = vector.load %arg10[%c0_16, %c0_17] : memref<8x128xf32, #tpu.memory_space<vmem>>, vector<8x128xf32>
      %c0_18 = arith.constant 0 : index
      %c0_19 = arith.constant 0 : index
      %20 = vector.load %arg9[%c0_18, %c0_19] : memref<8x128xf32, #tpu.memory_space<vmem>>, vector<8x128xf32>
      tpu.vector_store %arg9[%c0_18, %c0_19], %19 {strides = array<i32>} : memref<8x128xf32, #tpu.memory_space<vmem>>, vector<8x128xf32>,
    } else {
    }
    return
  }
  func.func @transform_0(%arg0: i32, %arg1: i32) -> (i32, i32) {
    %c0_i32 = arith.constant 0 : i32
    %c0_i32_0 = arith.constant 0 : i32
    return %arg0, %c0_i32 : i32, i32
  }
  func.func @transform_1(%arg0: i32, %arg1: i32) -> (i32, i32) {
    %c0_i32 = arith.constant 0 : i32
    %c0_i32_0 = arith.constant 0 : i32
    return %c0_i32, %arg1 : i32, i32
  }
  func.func @transform_2(%arg0: i32, %arg1: i32) -> (i32, i32) {
    %c0_i32 = arith.constant 0 : i32
    %c0_i32_0 = arith.constant 0 : i32
    return %c0_i32, %arg1 : i32, i32
  }
  func.func @transform_3(%arg0: i32, %arg1: i32) -> (i32, i32) {
    %c0_i32 = arith.constant 0 : i32
    %c0_i32_0 = arith.constant 0 : i32
    return %arg1, %c0_i32 : i32, i32
  }
  func.func @transform_4(%arg0: i32, %arg1: i32) -> (i32, i32) {
    %c0_i32 = arith.constant 0 : i32
    %c0_i32_0 = arith.constant 0 : i32
    %c0_i32_1 = arith.constant 0 : i32
    return %c0_i32, %c0_i32_0 : i32, i32
  }
  func.func @transform_5(%arg0: i32, %arg1: i32) -> (i32, i32) {
    %c0_i32 = arith.constant 0 : i32
    %c0_i32_0 = arith.constant 0 : i32
    %c0_i32_1 = arith.constant 0 : i32
    return %c0_i32, %c0_i32_0 : i32, i32
  }
  func.func @transform_6(%arg0: i32, %arg1: i32) -> (i32, i32) {
    %c0_i32 = arith.constant 0 : i32
    %c0_i32_0 = arith.constant 0 : i32
    %c0_i32_1 = arith.constant 0 : i32
    return %c0_i32, %c0_i32_0 : i32, i32
  }
  func.func @transform_7(%arg0: i32, %arg1: i32) -> (i32, i32) {
    %c0_i32 = arith.constant 0 : i32
    %c0_i32_0 = arith.constant 0 : i32
    return %arg0, %c0_i32 : i32, i32
  }
}

</mosaic_0001>

<llo_original>
// kernel: tpu_custom_call.1
$region0: #{tpu_custom_call.1}
  #allocation0 [shape = 'u32[]', space=smem, size = 0x4, offset = 0x4, fixed_abs, tag = 'smem constant byte address 0x4 - core index']
  #allocation1 [shape = 'u32[72,128]{1,0:T(1,128)}', space=vmem, size = 0x9000, scoped, tag = 'internal scratch']
  #allocation2 [shape = 'f32[8,128]{1,0:T(8,128)}', space=vmem, size = 0x1000, scoped, tag = 'scratch operand']
  #allocation3 [shape = 'f32[8,128]{1,0:T(8,128)}', space=vmem, size = 0x1000, scoped, tag = 'scratch operand']
  %s0 = inlined_call_operand.hbm [shape: f32[16,128], index: 0, kind: input, shape index: {}]
  %s1 = inlined_call_operand.hbm [shape: f32[128,256], index: 1, kind: input, shape index: {}]
  %s2 = inlined_call_operand.hbm [shape: f32[1,256], index: 2, kind: input, shape index: {}]
  %s3 = inlined_call_operand.hbm [shape: f32[256,128], index: 3, kind: input, shape index: {}]
  %s4 = inlined_call_operand.vmem [shape: f32[1,128], index: 4, kind: input, shape index: {}]
  %s5 = inlined_call_operand.vmem [shape: f32[1,128], index: 5, kind: input, shape index: {}]
  %s6 = inlined_call_operand.vmem [shape: f32[1,128], index: 6, kind: input, shape index: {}]
  %s7 = inlined_call_operand.hbm [shape: f32[16,128], index: 7, kind: output, shape index: {}]
  %s8 = sld [smem:[#allocation0]]
  $region85: #{tpu_custom_call.1} parent=0
    _
  %s10 = ssub.s32 1, %s8
  %s11 = scalar_select 0, %s10, %s8
  $region1: #{tpu_custom_call.1} parent=0
    #allocation4 [shape = 'u8[8192]{0}', space=vmem, size = 0x2000, scoped, tag = 'input window, operand 0']
    #allocation5 [shape = 's32[2]{0}', space=sflag, size = 0x8, scoped, tag = 'scoped memory for tpu_custom_call.1']
    #allocation6 [shape = 's32[2]{0}', space=sflag, size = 0x8, scoped, tag = 'scoped memory for tpu_custom_call.1']
    #allocation7 [shape = 'u8[131072]{0}', space=vmem, size = 0x20000, scoped, tag = 'input window, operand 1, single buffered']
    #allocation8 [shape = 's32[1]{0}', space=sflag, size = 0x4, scoped, tag = 'scoped memory for tpu_custom_call.1']
    #allocation9 [shape = 'u8[1024]{0}', space=vmem, size = 0x400, scoped, tag = 'input window, operand 2, single buffered']
    #allocation10 [shape = 'u8[131072]{0}', space=vmem, size = 0x20000, scoped, tag = 'input window, operand 3, single buffered']
    #allocation11 [shape = 's32[1]{0}', space=sflag, size = 0x4, scoped, tag = 'scoped memory for tpu_custom_call.1']
    #allocation12 [shape = 'u8[8192]{0}', space=vmem, size = 0x2000, scoped, tag = 'output window, operand 0']
    %12 = vsyncpa [#allocation5], 0
    %s13 = scalar_lea.sflag [#allocation5], 1
    %14 = vsyncpa %s13, 0
    %15 = vsyncpa [#allocation8], 0
    %16 = vsyncpa [#allocation11], 0
    %17 = vsyncpa [#allocation6], 0
    %s18 = scalar_lea.sflag [#allocation6], 1
    %19 = vsyncpa %s18, 0
    loop: start=0, step=1, limit=4
    $region2: #{tpu_custom_call.1} parent=1 // loop_pre_header
      _
    $region3: #{tpu_custom_call.1} parent=1 // loop_header
      %s21 = sphi 0, %s25
      %p22 = scmp.ge.s32.totalorder %s21, 4
      %s28 = sphi 0, %s40
      %s29 = sphi 0, %s36
      %s30 = sphi 0, %s28
      %s31 = sphi 0, %s29
      %s32 = sphi 0, %s30
      %s33 = sphi 0, %s31
      %s43 = sphi 0, %s45
      %s46 = sphi 0, %s43
      %s47 = sphi 0, %s46
      %s63 = sphi 0, %s47
      %s69 = sphi 0, %s71
      %s72 = sphi 0, %s69
      %s73 = sphi 0, %s72
      %s89 = sphi 0, %s73
      %s95 = sphi 0, %s97
      %s98 = sphi 0, %s95
      %s99 = sphi 0, %s98
      %s115 = sphi 0, %s99
      %s121 = sphi 0, %s123
      %s124 = sphi 0, %s121
      %s125 = sphi 0, %s124
      %s141 = sphi 0, %s125
      %s145 = sphi 0, %s145
      %s147 = sphi 0, %s145
      %s148 = sphi 0, %s147
      %s162 = sphi 0, %s148
      %s166 = sphi 0, %s166
      %s168 = sphi 0, %s166
      %s169 = sphi 0, %s168
      %s183 = sphi 0, %s169
      %s187 = sphi 0, %s187
      %s189 = sphi 0, %s187
      %s190 = sphi 0, %s189
      %s204 = sphi 0, %s190
      %s210 = sphi 0, %s212
      %s213 = sphi 0, %s210
      %s214 = sphi 0, %s213
      %s230 = sphi 0, %s214
    $region4: #{tpu_custom_call.1} parent=1 // loop_header_branch
      %24 = sbr.rel (%p22) target = $region8
    $region5: #{tpu_custom_call.1} parent=1 // loop_body
      %s26 = ssub.s32 %s21, 1
      %s27 = ssub.s32 %s21, 2
      %s34 = sadd.s32 1, %s29
      %p35 = scmp.ge.s32.totalorder %s34, 1
      %s36 = scalar_select %p35, 0, %s34
      %s37 = sadd.s32 1, %s28
      %s38 = scalar_select %p35, %s37, %s28
      %p39 = scmp.ge.s32.totalorder %s38, 2
      %s40 = scalar_select %p39, 0, %s38
      %s41 = ssub.s32 %s28, %s40
      %p42 = scmp.eq.s32.totalorder %s41, 0
      %s44 = sadd.s32 %s43, 1
      %s45 = scalar_select %p42, %s43, %s44
      %p48 = pneg %p42
      %p49 = scmp.eq.s32.totalorder %s21, 1
      %p50 = por %p48, %p49
      %p51 = scmp.ne.s32.totalorder %s43, %s46
      %p52 = scmp.eq.s32.totalorder %s21, 0
      %p53 = por %p51, %p52
      %p54 = scmp.ne.s32.totalorder %s43, %s46
      %p55 = scmp.eq.s32.totalorder %s26, 1
      %p56 = por %p54, %p55
      %p57 = scmp.ne.s32.totalorder %s46, %s47
      %p58 = scmp.eq.s32.totalorder %s26, 0
      %p59 = por %p57, %p58
      %p60 = scmp.ne.s32.totalorder %s46, %s47
      %p61 = scmp.eq.s32.totalorder %s27, 1
      %p62 = por %p60, %p61
      %p64 = scmp.ne.s32.totalorder %s47, %s63
      %p65 = scmp.eq.s32.totalorder %s27, 0
      %p66 = por %p64, %p65
      %s67 = ssub.s32 %s29, %s36
      %p68 = scmp.eq.s32.totalorder %s67, 0
      %s70 = sadd.s32 %s69, 1
      %s71 = scalar_select %p68, %s69, %s70
      %p74 = pneg %p68
      %p75 = scmp.eq.s32.totalorder %s21, 1
      %p76 = por %p74, %p75
      %p77 = scmp.ne.s32.totalorder %s69, %s72
      %p78 = scmp.eq.s32.totalorder %s21, 0
      %p79 = por %p77, %p78
      %p80 = scmp.ne.s32.totalorder %s69, %s72
      %p81 = scmp.eq.s32.totalorder %s26, 1
      %p82 = por %p80, %p81
      %p83 = scmp.ne.s32.totalorder %s72, %s73
      %p84 = scmp.eq.s32.totalorder %s26, 0
      %p85 = por %p83, %p84
      %p86 = scmp.ne.s32.totalorder %s72, %s73
      %p87 = scmp.eq.s32.totalorder %s27, 1
      %p88 = por %p86, %p87
      %p90 = scmp.ne.s32.totalorder %s73, %s89
      %p91 = scmp.eq.s32.totalorder %s27, 0
      %p92 = por %p90, %p91
      %s93 = ssub.s32 %s29, %s36
      %p94 = scmp.eq.s32.totalorder %s93, 0
      %s96 = sadd.s32 %s95, 1
      %s97 = scalar_select %p94, %s95, %s96
      %p100 = pneg %p94
      %p101 = scmp.eq.s32.totalorder %s21, 1
      %p102 = por %p100, %p101
      %p103 = scmp.ne.s32.totalorder %s95, %s98
      %p104 = scmp.eq.s32.totalorder %s21, 0
      %p105 = por %p103, %p104
      %p106 = scmp.ne.s32.totalorder %s95, %s98
      %p107 = scmp.eq.s32.totalorder %s26, 1
      %p108 = por %p106, %p107
      %p109 = scmp.ne.s32.totalorder %s98, %s99
      %p110 = scmp.eq.s32.totalorder %s26, 0
      %p111 = por %p109, %p110
      %p112 = scmp.ne.s32.totalorder %s98, %s99
      %p113 = scmp.eq.s32.totalorder %s27, 1
      %p114 = por %p112, %p113
      %p116 = scmp.ne.s32.totalorder %s99, %s115
      %p117 = scmp.eq.s32.totalorder %s27, 0
      %p118 = por %p116, %p117
      %s119 = ssub.s32 %s29, %s36
      %p120 = scmp.eq.s32.totalorder %s119, 0
      %s122 = sadd.s32 %s121, 1
      %s123 = scalar_select %p120, %s121, %s122
      %p126 = pneg %p120
      %p127 = scmp.eq.s32.totalorder %s21, 1
      %p128 = por %p126, %p127
      %p129 = scmp.ne.s32.totalorder %s121, %s124
      %p130 = scmp.eq.s32.totalorder %s21, 0
      %p131 = por %p129, %p130
      %p132 = scmp.ne.s32.totalorder %s121, %s124
      %p133 = scmp.eq.s32.totalorder %s26, 1
      %p134 = por %p132, %p133
      %p135 = scmp.ne.s32.totalorder %s124, %s125
      %p136 = scmp.eq.s32.totalorder %s26, 0
      %p137 = por %p135, %p136
      %p138 = scmp.ne.s32.totalorder %s124, %s125
      %p139 = scmp.eq.s32.totalorder %s27, 1
      %p140 = por %p138, %p139
      %p142 = scmp.ne.s32.totalorder %s125, %s141
      %p143 = scmp.eq.s32.totalorder %s27, 0
      %p144 = por %p142, %p143
      %s146 = sadd.s32 %s145, 1
      %p149 = scmp.eq.s32.totalorder %s21, 1
      %p150 = scmp.ne.s32.totalorder %s145, %s147
      %p151 = scmp.eq.s32.totalorder %s21, 0
      %p152 = por %p150, %p151
      %p153 = scmp.ne.s32.totalorder %s145, %s147
      %p154 = scmp.eq.s32.totalorder %s26, 1
      %p155 = por %p153, %p154
      %p156 = scmp.ne.s32.totalorder %s147, %s148
      %p157 = scmp.eq.s32.totalorder %s26, 0
      %p158 = por %p156, %p157
      %p159 = scmp.ne.s32.totalorder %s147, %s148
      %p160 = scmp.eq.s32.totalorder %s27, 1
      %p161 = por %p159, %p160
      %p163 = scmp.ne.s32.totalorder %s148, %s162
      %p164 = scmp.eq.s32.totalorder %s27, 0
      %p165 = por %p163, %p164
      %s167 = sadd.s32 %s166, 1
      %p170 = scmp.eq.s32.totalorder %s21, 1
      %p171 = scmp.ne.s32.totalorder %s166, %s168
      %p172 = scmp.eq.s32.totalorder %s21, 0
      %p173 = por %p171, %p172
      %p174 = scmp.ne.s32.totalorder %s166, %s168
      %p175 = scmp.eq.s32.totalorder %s26, 1
      %p176 = por %p174, %p175
      %p177 = scmp.ne.s32.totalorder %s168, %s169
      %p178 = scmp.eq.s32.totalorder %s26, 0
      %p179 = por %p177, %p178
      %p180 = scmp.ne.s32.totalorder %s168, %s169
      %p181 = scmp.eq.s32.totalorder %s27, 1
      %p182 = por %p180, %p181
      %p184 = scmp.ne.s32.totalorder %s169, %s183
      %p185 = scmp.eq.s32.totalorder %s27, 0
      %p186 = por %p184, %p185
      %s188 = sadd.s32 %s187, 1
      %p191 = scmp.eq.s32.totalorder %s21, 1
      %p192 = scmp.ne.s32.totalorder %s187, %s189
      %p193 = scmp.eq.s32.totalorder %s21, 0
      %p194 = por %p192, %p193
      %p195 = scmp.ne.s32.totalorder %s187, %s189
      %p196 = scmp.eq.s32.totalorder %s26, 1
      %p197 = por %p195, %p196
      %p198 = scmp.ne.s32.totalorder %s189, %s190
      %p199 = scmp.eq.s32.totalorder %s26, 0
      %p200 = por %p198, %p199
      %p201 = scmp.ne.s32.totalorder %s189, %s190
      %p202 = scmp.eq.s32.totalorder %s27, 1
      %p203 = por %p201, %p202
      %p205 = scmp.ne.s32.totalorder %s190, %s204
      %p206 = scmp.eq.s32.totalorder %s27, 0
      %p207 = por %p205, %p206
      %s208 = ssub.s32 %s28, %s40
      %p209 = scmp.eq.s32.totalorder %s208, 0
      %s211 = sadd.s32 %s210, 1
      %s212 = scalar_select %p209, %s210, %s211
      %p215 = pneg %p209
      %p216 = scmp.eq.s32.totalorder %s21, 1
      %p217 = por %p215, %p216
      %p218 = scmp.ne.s32.totalorder %s210, %s213
      %p219 = scmp.eq.s32.totalorder %s21, 0
      %p220 = por %p218, %p219
      %p221 = scmp.ne.s32.totalorder %s210, %s213
      %p222 = scmp.eq.s32.totalorder %s26, 1
      %p223 = por %p221, %p222
      %p224 = scmp.ne.s32.totalorder %s213, %s214
      %p225 = scmp.eq.s32.totalorder %s26, 0
      %p226 = por %p224, %p225
      %p227 = scmp.ne.s32.totalorder %s213, %s214
      %p228 = scmp.eq.s32.totalorder %s27, 1
      %p229 = por %p227, %p228
      %p231 = scmp.ne.s32.totalorder %s214, %s230
      %p232 = scmp.eq.s32.totalorder %s27, 0
      %p233 = por %p231, %p232
      %p234 = scmp.le.s32.totalorder 1, %s21
      %p235 = scmp.lt.s32.totalorder %s21, 3
      %p236 = pnand %p234, %p235
      %p237 = pneg %p236
      // Predicated region
      $region9: #{tpu_custom_call.1} parent=5 // pred_check
        _
      $region10: #{tpu_custom_call.1} parent=5 // pred_check_branch
        %239 = sbr.rel (%p236) target = $region12
      $region11: #{tpu_custom_call.1} parent=5 // pred_region
        %s240 = ssub.s32 %s21, 1
        // Predicated region
        $region13: #{tpu_custom_call.1} parent=11 // pred_check
          %p241 = pneg %p85
        $region14: #{tpu_custom_call.1} parent=11 // pred_check_branch
          %243 = sbr.rel (%p241) target = $region16
        $region15: #{tpu_custom_call.1} parent=11 // pred_region
          %s244 = smul.u32 2, %s31
          %246 = vsyncadd [#allocation8], 0
          %s247 = smul.addr %s244, 8
          %s248 = scalar_lea.hbm %s1, %s247
          %s249 = sshll.u32 %s248, 4
          %s250 = int_to_ptr.hbm [resolvable:$true] %s249
          %s251 = sshll.u32 [#allocation7], 4
          %s252 = int_to_ptr.vmem [resolvable:$true] %s251
          %257 = dma.hbm_to_vmem [thread:$0]  %s250, 4096, %s252, [#allocation8], 256, 256, 16
        $region16: #{tpu_custom_call.1} parent=11 // pred_fallthru
          _
        // Predicated region
        $region17: #{tpu_custom_call.1} parent=11 // pred_check
          %p258 = pneg %p111
        $region18: #{tpu_custom_call.1} parent=11 // pred_check_branch
          %260 = sbr.rel (%p258) target = $region20
        $region19: #{tpu_custom_call.1} parent=11 // pred_region
          %s261 = smul.u32 2, %s31
          %263 = vsyncadd [#allocation8], 0
          %s264 = scalar_lea.hbm %s2, %s261
          %s266 = sshll.u32 %s264, 4
          %s267 = int_to_ptr.hbm [resolvable:$true] %s266
          %s268 = sshll.u32 [#allocation9], 4
          %s269 = int_to_ptr.vmem [resolvable:$true] %s268
          %271 = dma.hbm_to_vmem [thread:$0]  %s267, 32, %s269, [#allocation8]
        $region20: #{tpu_custom_call.1} parent=11 // pred_fallthru
          _
        // Predicated region
        $region21: #{tpu_custom_call.1} parent=11 // pred_check
          %p272 = pneg %p137
        $region22: #{tpu_custom_call.1} parent=11 // pred_check_branch
          %274 = sbr.rel (%p272) target = $region24
        $region23: #{tpu_custom_call.1} parent=11 // pred_region
          %s275 = smul.u32 32, %s31
          %277 = vsyncadd [#allocation11], 0
          %s278 = smul.addr %s275, 8
          %s279 = scalar_lea.hbm %s3, %s278
          %s280 = sshll.u32 %s279, 4
          %s281 = int_to_ptr.hbm [resolvable:$true] %s280
          %s282 = sshll.u32 [#allocation10], 4
          %s283 = int_to_ptr.vmem [resolvable:$true] %s282
          %288 = dma.hbm_to_vmem [thread:$0]  %s281, 4096, %s283, [#allocation11], 128, 128, 8
        $region24: #{tpu_custom_call.1} parent=11 // pred_fallthru
          _
        // Predicated region
        $region25: #{tpu_custom_call.1} parent=11 // pred_check
          %p289 = pneg %p158
        $region26: #{tpu_custom_call.1} parent=11 // pred_check_branch
          %291 = sbr.rel (%p289) target = $region28
        $region27: #{tpu_custom_call.1} parent=11 // pred_region
          _
        $region28: #{tpu_custom_call.1} parent=11 // pred_fallthru
          _
        // Predicated region
        $region29: #{tpu_custom_call.1} parent=11 // pred_check
          %p292 = pneg %p179
        $region30: #{tpu_custom_call.1} parent=11 // pred_check_branch
          %294 = sbr.rel (%p292) target = $region32
        $region31: #{tpu_custom_call.1} parent=11 // pred_region
          _
        $region32: #{tpu_custom_call.1} parent=11 // pred_fallthru
          _
        // Predicated region
        $region33: #{tpu_custom_call.1} parent=11 // pred_check
          %p295 = pneg %p200
        $region34: #{tpu_custom_call.1} parent=11 // pred_check_branch
          %297 = sbr.rel (%p295) target = $region36
        $region35: #{tpu_custom_call.1} parent=11 // pred_region
          _
        $region36: #{tpu_custom_call.1} parent=11 // pred_fallthru
          _
      $region12: #{tpu_custom_call.1} parent=5 // pred_fallthru
        _
      %p298 = scmp.lt.s32.totalorder %s21, 2
      // Predicated region
      $region37: #{tpu_custom_call.1} parent=5 // pred_check
        %p299 = pneg %p298
      $region38: #{tpu_custom_call.1} parent=5 // pred_check_branch
        %301 = sbr.rel (%p299) target = $region40
      $region39: #{tpu_custom_call.1} parent=5 // pred_region
        // Predicated region
        $region41: #{tpu_custom_call.1} parent=39 // pred_check
          %p302 = pneg %p53
        $region42: #{tpu_custom_call.1} parent=39 // pred_check_branch
          %304 = sbr.rel (%p302) target = $region44
        $region43: #{tpu_custom_call.1} parent=39 // pred_region
          %s305 = sand.u32 %s43, 1
          %s306 = scalar_lea.sflag [#allocation5], %s305
          %s307 = sand.u32 %s43, 1
          %s308 = smul.addr %s307, 8
          %s309 = scalar_lea.vmem [#allocation4], %s308
          %311 = vsyncadd %s306, 0
          %s312 = smul.addr %s28, 8
          %s313 = scalar_lea.hbm %s0, %s312
          %s315 = sshll.u32 %s313, 4
          %s316 = int_to_ptr.hbm [resolvable:$true] %s315
          %s317 = sshll.u32 %s309, 4
          %s318 = int_to_ptr.vmem [resolvable:$true] %s317
          %320 = dma.hbm_to_vmem [thread:$0]  %s316, 128, %s318, %s306
        $region44: #{tpu_custom_call.1} parent=39 // pred_fallthru
          _
      $region40: #{tpu_custom_call.1} parent=5 // pred_fallthru
        _
      %p321 = scmp.le.s32.totalorder 1, %s21
      %p322 = scmp.lt.s32.totalorder %s21, 3
      %p323 = pnand %p321, %p322
      %p324 = pneg %p323
      // Predicated region
      $region45: #{tpu_custom_call.1} parent=5 // pred_check
        _
      $region46: #{tpu_custom_call.1} parent=5 // pred_check_branch
        %326 = sbr.rel (%p323) target = $region48
      $region47: #{tpu_custom_call.1} parent=5 // pred_region
        %s327 = ssub.s32 %s21, 1
        %s328 = sand.u32 %s46, 1
        %s329 = scalar_lea.sflag [#allocation5], %s328
        %s330 = sand.u32 %s46, 1
        %s331 = smul.addr %s330, 8
        %s332 = scalar_lea.vmem [#allocation4], %s331
        // Predicated region
        $region49: #{tpu_custom_call.1} parent=47 // pred_check
          %p333 = pneg %p59
        $region50: #{tpu_custom_call.1} parent=47 // pred_check_branch
          %335 = sbr.rel (%p333) target = $region52
        $region51: #{tpu_custom_call.1} parent=47 // pred_region
          %337 = dma.done %s329, 128
        $region52: #{tpu_custom_call.1} parent=47 // pred_fallthru
          _
        // Predicated region
        $region53: #{tpu_custom_call.1} parent=47 // pred_check
          %p338 = pneg %p85
        $region54: #{tpu_custom_call.1} parent=47 // pred_check_branch
          %340 = sbr.rel (%p338) target = $region56
        $region55: #{tpu_custom_call.1} parent=47 // pred_region
          %342 = dma.done [#allocation8], 4096
        $region56: #{tpu_custom_call.1} parent=47 // pred_fallthru
          _
        // Predicated region
        $region57: #{tpu_custom_call.1} parent=47 // pred_check
          %p343 = pneg %p111
        $region58: #{tpu_custom_call.1} parent=47 // pred_check_branch
          %345 = sbr.rel (%p343) target = $region60
        $region59: #{tpu_custom_call.1} parent=47 // pred_region
          %347 = dma.done [#allocation8], 32
        $region60: #{tpu_custom_call.1} parent=47 // pred_fallthru
          _
        // Predicated region
        $region61: #{tpu_custom_call.1} parent=47 // pred_check
          %p348 = pneg %p137
        $region62: #{tpu_custom_call.1} parent=47 // pred_check_branch
          %350 = sbr.rel (%p348) target = $region64
        $region63: #{tpu_custom_call.1} parent=47 // pred_region
          %352 = dma.done [#allocation11], 4096
        $region64: #{tpu_custom_call.1} parent=47 // pred_fallthru
          _
        %s353 = sand.u32 %s46, 1
        %s354 = scalar_lea.sflag [#allocation5], %s353
        %s355 = sand.u32 %s46, 1
        %s356 = smul.addr %s355, 8
        %s357 = scalar_lea.vmem [#allocation4], %s356
        %p358 = pneg %p59
        %p359 = pneg %p56
        %p360 = pneg %p85
        %p361 = pneg %p82
        %p362 = pneg %p111
        %p363 = pneg %p108
        %p364 = pneg %p137
        %p365 = pneg %p134
        %p366 = pneg %p158
        %p367 = pneg %p155
        %p368 = pneg %p179
        %p369 = pneg %p176
        %p370 = pneg %p200
        %p371 = pneg %p197
        %p372 = pneg %p226
        %p373 = pneg %p223
        %s374 = sand.u32 %s213, 1
        %s375 = scalar_lea.sflag [#allocation6], %s374
        %s376 = sand.u32 %s213, 1
        %s377 = smul.addr %s376, 8
        %s378 = scalar_lea.vmem [#allocation12], %s377
        %s379 = smul.u32 2, %s31
        %s380 = smul.u32 2, %s31
        %s381 = smul.u32 32, %s31
        %p382 = scmp.eq.s32.totalorder %s31, 0
        // Predicated region
        $region65: #{tpu_custom_call.1} parent=47 // pred_check
          %p383 = pneg %p382
        $region66: #{tpu_custom_call.1} parent=47 // pred_check_branch
          %385 = sbr.rel (%p383) target = $region68
        $region67: #{tpu_custom_call.1} parent=47 // pred_region
          %v386 = vld [vmem:[%s332] sm:$0xff]
          %387 = vadd.xlane.f32.xlu0 %v386
          %v388 = vpop.xlane.xlu0 %387
          %v389 = vrcp.pop 128.0
          %v390 = vmul.f32 128.0, %v389
          %v391 = vsub.f32 1.0, %v390
          %v392 = vmul.f32 %v389, %v391
          %v393 = vadd.f32 %v389, %v392
          %vm394 = vweird.f32 %v389
          %v395 = vsel %vm394, %v389, %v393
          %v396 = vmul.f32 %v388, %v395
          %v397 = vsub.f32 %v386, %v396
          %v398 = vmul.f32 %v397, %v397
          %399 = vadd.xlane.f32.xlu0 %v398
          %v400 = vpop.xlane.xlu0 %399
          %v401 = vmul.f32 %v400, %v395
          %v402 = vadd.f32 %v401, 1e-06
          %v403 = vrsqrt.pop %v402
          %v404 = vmul.f32 %v403, %v402
          %v405 = vmul.f32 %v404, %v403
          %v406 = vmul.f32 0.5, %v405
          %v407 = vsub.f32 1.5, %v406
          %v408 = vmul.f32 %v403, %v407
          %vm409 = vweird.f32 %v402
          %vm410 = vweird.f32 %v403
          %vm411 = vmor %vm409, %vm410
          %v412 = vsel %vm411, %v403, %v408
          %v413 = vmul.f32 %v397, %v412
          %v414 = vld [vmem:[%s5] sm:$0x1]
          %v416 = vperm.slane %v414, 0
          %v418 = vmul.f32 %v413, %v416
          %v419 = vld [vmem:[%s6] sm:$0x1]
          %v421 = vperm.slane %v419, 0
          %v423 = vadd.f32 %v418, %v421
          %424 = vst [vmem:[#allocation3] sm:$0xff] %v423
          %v425 = vld [vmem:[%s4] sm:$0x1]
          %v427 = vperm.slane %v425, 0
          %v429 = vadd.f32 %v386, %v427
          %430 = vst [vmem:[#allocation2] sm:$0xff] %v429
        $region68: #{tpu_custom_call.1} parent=47 // pred_fallthru
          _
        %v431 = vld [vmem:[#allocation3] sm:$0xff]
        %v432 = vld [vmem:[#allocation7] sm:$0xff]
        %v433 = vld [vmem:[#allocation7 + $0x8] sm:$0xff]
        %v434 = vld [vmem:[#allocation7 + $0x10] sm:$0xff]
        %v435 = vld [vmem:[#allocation7 + $0x18] sm:$0xff]
        %v436 = vld [vmem:[#allocation7 + $0x20] sm:$0xff]
        %v437 = vld [vmem:[#allocation7 + $0x28] sm:$0xff]
        %v438 = vld [vmem:[#allocation7 + $0x30] sm:$0xff]
        %v439 = vld [vmem:[#allocation7 + $0x38] sm:$0xff]
        %v440 = vld [vmem:[#allocation7 + $0x40] sm:$0xff]
        %v441 = vld [vmem:[#allocation7 + $0x48] sm:$0xff]
        %v442 = vld [vmem:[#allocation7 + $0x50] sm:$0xff]
        %v443 = vld [vmem:[#allocation7 + $0x58] sm:$0xff]
        %v444 = vld [vmem:[#allocation7 + $0x60] sm:$0xff]
        %v445 = vld [vmem:[#allocation7 + $0x68] sm:$0xff]
        %v446 = vld [vmem:[#allocation7 + $0x70] sm:$0xff]
        %v447 = vld [vmem:[#allocation7 + $0x78] sm:$0xff]
        %v448 = vld [vmem:[#allocation7 + $0x80] sm:$0xff]
        %v449 = vld [vmem:[#allocation7 + $0x88] sm:$0xff]
        %v450 = vld [vmem:[#allocation7 + $0x90] sm:$0xff]
        %v451 = vld [vmem:[#allocation7 + $0x98] sm:$0xff]
        %v452 = vld [vmem:[#allocation7 + $0xa0] sm:$0xff]
        %v453 = vld [vmem:[#allocation7 + $0xa8] sm:$0xff]
        %v454 = vld [vmem:[#allocation7 + $0xb0] sm:$0xff]
        %v455 = vld [vmem:[#allocation7 + $0xb8] sm:$0xff]
        %v456 = vld [vmem:[#allocation7 + $0xc0] sm:$0xff]
        %v457 = vld [vmem:[#allocation7 + $0xc8] sm:$0xff]
        %v458 = vld [vmem:[#allocation7 + $0xd0] sm:$0xff]
        %v459 = vld [vmem:[#allocation7 + $0xd8] sm:$0xff]
        %v460 = vld [vmem:[#allocation7 + $0xe0] sm:$0xff]
        %v461 = vld [vmem:[#allocation7 + $0xe8] sm:$0xff]
        %v462 = vld [vmem:[#allocation7 + $0xf0] sm:$0xff]
        %v463 = vld [vmem:[#allocation7 + $0xf8] sm:$0xff]
        %v464 = vld [vmem:[#allocation9] sm:$0x3]
        %v466 = vperm.slane %v464, 0
        %v467 = vperm.slane %v464, 1
        %470 = vmatpush.msra.mxu0 %v462
        %471 = vmatpush.msra.mxu0 %v460
        %472 = vmatpush.msra.mxu0 %v458
        %473 = vmatpush.msra.mxu0 %v456
        %474 = vmatpush.msra.mxu0 %v454
        %475 = vmatpush.msra.mxu0 %v452
        %476 = vmatpush.msra.mxu0 %v450
        %477 = vmatpush.msra.mxu0 %v448
        %478 = vmatpush.msra.mxu0 %v446
        %479 = vmatpush.msra.mxu0 %v444
        %480 = vmatpush.msra.mxu0 %v442
        %481 = vmatpush.msra.mxu0 %v440
        %482 = vmatpush.msra.mxu0 %v438
        %483 = vmatpush.msra.mxu0 %v436
        %484 = vmatpush.msra.mxu0 %v434
        %485 = vmatpush.msra.mxu0 %v432
        %486 = vmatmul.f32.gmra.mxu0 %v431
        %v487 = vpop.f32.mrf.mxu0
        %v488 = vadd.f32 %v466, %v487
        %489 = vdwg.mxu0
        %490 = vmatpush.msra.mxu0 %v463
        %491 = vmatpush.msra.mxu0 %v461
        %492 = vmatpush.msra.mxu0 %v459
        %493 = vmatpush.msra.mxu0 %v457
        %494 = vmatpush.msra.mxu0 %v455
        %495 = vmatpush.msra.mxu0 %v453
        %496 = vmatpush.msra.mxu0 %v451
        %497 = vmatpush.msra.mxu0 %v449
        %498 = vmatpush.msra.mxu0 %v447
        %499 = vmatpush.msra.mxu0 %v445
        %500 = vmatpush.msra.mxu0 %v443
        %501 = vmatpush.msra.mxu0 %v441
        %502 = vmatpush.msra.mxu0 %v439
        %503 = vmatpush.msra.mxu0 %v437
        %504 = vmatpush.msra.mxu0 %v435
        %505 = vmatpush.msra.mxu0 %v433
        %506 = vmatmul.f32.gmra.mxu0 %v431
        %v507 = vpop.f32.mrf.mxu0
        %v508 = vadd.f32 %v467, %v507
        %509 = vdwg.mxu0
        %v510 = vmax.f32 %v488, 0.0
        %v511 = vmax.f32 %v508, 0.0
        %v512 = vld [vmem:[#allocation2] sm:$0xff]
        %v513 = vld [vmem:[#allocation10] sm:$0xff]
        %v514 = vld [vmem:[#allocation10 + $0x8] sm:$0xff]
        %v515 = vld [vmem:[#allocation10 + $0x10] sm:$0xff]
        %v516 = vld [vmem:[#allocation10 + $0x18] sm:$0xff]
        %v517 = vld [vmem:[#allocation10 + $0x20] sm:$0xff]
        %v518 = vld [vmem:[#allocation10 + $0x28] sm:$0xff]
        %v519 = vld [vmem:[#allocation10 + $0x30] sm:$0xff]
        %v520 = vld [vmem:[#allocation10 + $0x38] sm:$0xff]
        %v521 = vld [vmem:[#allocation10 + $0x40] sm:$0xff]
        %v522 = vld [vmem:[#allocation10 + $0x48] sm:$0xff]
        %v523 = vld [vmem:[#allocation10 + $0x50] sm:$0xff]
        %v524 = vld [vmem:[#allocation10 + $0x58] sm:$0xff]
        %v525 = vld [vmem:[#allocation10 + $0x60] sm:$0xff]
        %v526 = vld [vmem:[#allocation10 + $0x68] sm:$0xff]
        %v527 = vld [vmem:[#allocation10 + $0x70] sm:$0xff]
        %v528 = vld [vmem:[#allocation10 + $0x78] sm:$0xff]
        %v529 = vld [vmem:[#allocation10 + $0x80] sm:$0xff]
        %v530 = vld [vmem:[#allocation10 + $0x88] sm:$0xff]
        %v531 = vld [vmem:[#allocation10 + $0x90] sm:$0xff]
        %v532 = vld [vmem:[#allocation10 + $0x98] sm:$0xff]
        %v533 = vld [vmem:[#allocation10 + $0xa0] sm:$0xff]
        %v534 = vld [vmem:[#allocation10 + $0xa8] sm:$0xff]
        %v535 = vld [vmem:[#allocation10 + $0xb0] sm:$0xff]
        %v536 = vld [vmem:[#allocation10 + $0xb8] sm:$0xff]
        %v537 = vld [vmem:[#allocation10 + $0xc0] sm:$0xff]
        %v538 = vld [vmem:[#allocation10 + $0xc8] sm:$0xff]
        %v539 = vld [vmem:[#allocation10 + $0xd0] sm:$0xff]
        %v540 = vld [vmem:[#allocation10 + $0xd8] sm:$0xff]
        %v541 = vld [vmem:[#allocation10 + $0xe0] sm:$0xff]
        %v542 = vld [vmem:[#allocation10 + $0xe8] sm:$0xff]
        %v543 = vld [vmem:[#allocation10 + $0xf0] sm:$0xff]
        %v544 = vld [vmem:[#allocation10 + $0xf8] sm:$0xff]
        %545 = vmatpush.msra.mxu0 %v528
        %546 = vmatpush.msra.mxu0 %v527
        %547 = vmatpush.msra.mxu0 %v526
        %548 = vmatpush.msra.mxu0 %v525
        %549 = vmatpush.msra.mxu0 %v524
        %550 = vmatpush.msra.mxu0 %v523
        %551 = vmatpush.msra.mxu0 %v522
        %552 = vmatpush.msra.mxu0 %v521
        %553 = vmatpush.msra.mxu0 %v520
        %554 = vmatpush.msra.mxu0 %v519
        %555 = vmatpush.msra.mxu0 %v518
        %556 = vmatpush.msra.mxu0 %v517
        %557 = vmatpush.msra.mxu0 %v516
        %558 = vmatpush.msra.mxu0 %v515
        %559 = vmatpush.msra.mxu0 %v514
        %560 = vmatpush.msra.mxu0 %v513
        %561 = vmatmul.f32.gmra.mxu0 %v510
        %v562 = vpop.f32.mrf.mxu0
        %v563 = vadd.f32 0.0, %v562
        %564 = vdwg.mxu0
        %565 = vmatpush.msra.mxu0 %v544
        %566 = vmatpush.msra.mxu0 %v543
        %567 = vmatpush.msra.mxu0 %v542
        %568 = vmatpush.msra.mxu0 %v541
        %569 = vmatpush.msra.mxu0 %v540
        %570 = vmatpush.msra.mxu0 %v539
        %571 = vmatpush.msra.mxu0 %v538
        %572 = vmatpush.msra.mxu0 %v537
        %573 = vmatpush.msra.mxu0 %v536
        %574 = vmatpush.msra.mxu0 %v535
        %575 = vmatpush.msra.mxu0 %v534
        %576 = vmatpush.msra.mxu0 %v533
        %577 = vmatpush.msra.mxu0 %v532
        %578 = vmatpush.msra.mxu0 %v531
        %579 = vmatpush.msra.mxu0 %v530
        %580 = vmatpush.msra.mxu0 %v529
        %581 = vmatmul.f32.gmra.mxu0 %v511
        %v582 = vpop.f32.mrf.mxu0
        %v583 = vadd.f32 %v563, %v582
        %584 = vdwg.mxu0
        %v585 = vadd.f32 %v512, %v583
        %586 = vst [vmem:[#allocation2] sm:$0xff] %v585
        // Predicated region
        $region69: #{tpu_custom_call.1} parent=47 // pred_check
          %p587 = pneg %p382
        $region70: #{tpu_custom_call.1} parent=47 // pred_check_branch
          %589 = sbr.rel (%p587) target = $region72
        $region71: #{tpu_custom_call.1} parent=47 // pred_region
          %v590 = vld [vmem:[#allocation2] sm:$0xff]
          %591 = vst [vmem:[%s378] sm:$0xff] %v590
        $region72: #{tpu_custom_call.1} parent=47 // pred_fallthru
          _
        %s592 = sand.u32 %s213, 1
        %s593 = scalar_lea.sflag [#allocation6], %s592
        %s594 = sand.u32 %s213, 1
        %s595 = smul.addr %s594, 8
        %s596 = scalar_lea.vmem [#allocation12], %s595
        // Predicated region
        $region73: #{tpu_custom_call.1} parent=47 // pred_check
          %p597 = pneg %p223
        $region74: #{tpu_custom_call.1} parent=47 // pred_check_branch
          %599 = sbr.rel (%p597) target = $region76
        $region75: #{tpu_custom_call.1} parent=47 // pred_region
          %601 = vsyncadd %s593, 0
          %s602 = smul.addr %s30, 8
          %s603 = scalar_lea.hbm %s7, %s602
          %s605 = sshll.u32 %s596, 4
          %s606 = int_to_ptr.vmem [resolvable:$true] %s605
          %s607 = sshll.u32 %s603, 4
          %s608 = int_to_ptr.hbm [resolvable:$true] %s607
          %610 = dma.vmem_to_hbm [thread:$0]  %s606, 128, %s608, %s593
        $region76: #{tpu_custom_call.1} parent=47 // pred_fallthru
          _
      $region48: #{tpu_custom_call.1} parent=5 // pred_fallthru
        _
      %p611 = scmp.le.s32.totalorder 2, %s21
      // Predicated region
      $region77: #{tpu_custom_call.1} parent=5 // pred_check
        %p612 = pneg %p611
      $region78: #{tpu_custom_call.1} parent=5 // pred_check_branch
        %614 = sbr.rel (%p612) target = $region80
      $region79: #{tpu_custom_call.1} parent=5 // pred_region
        %s615 = ssub.s32 %s21, 2
        // Predicated region
        $region81: #{tpu_custom_call.1} parent=79 // pred_check
          %p616 = pneg %p229
        $region82: #{tpu_custom_call.1} parent=79 // pred_check_branch
          %618 = sbr.rel (%p616) target = $region84
        $region83: #{tpu_custom_call.1} parent=79 // pred_region
          %s619 = sand.u32 %s214, 1
          %s620 = scalar_lea.sflag [#allocation6], %s619
          %s621 = sand.u32 %s214, 1
          %s622 = smul.addr %s621, 8
          %s623 = scalar_lea.vmem [#allocation12], %s622
          %625 = dma.done %s620, 128
        $region84: #{tpu_custom_call.1} parent=79 // pred_fallthru
          _
      $region80: #{tpu_custom_call.1} parent=5 // pred_fallthru
        _
    $region6: #{tpu_custom_call.1} parent=1 // loop_footer
      %s25 = sadd.s32 1, %s21
    $region7: #{tpu_custom_call.1} parent=1 // loop_footer_branch
      %20 = sbr.rel target = $region3
    $region8: #{tpu_custom_call.1} parent=1 // loop_exit
      _
    %626 = vsyncpa [#allocation5], 1
    %s627 = scalar_lea.sflag [#allocation5], 1
    %628 = vsyncpa %s627, 1
    %629 = vsyncpa [#allocation8], 1
    %630 = vsyncpa [#allocation11], 1
    %631 = vsyncpa [#allocation6], 1
    %s632 = scalar_lea.sflag [#allocation6], 1
    %633 = vsyncpa %s632, 1

</llo_original>
